<compile_context>
chip_gen: v7x
topology: tpu7x:2x2x1
jax: 0.10.0
libtpu: 0.0.40
codegen_flags: <defaults>
</compile_context>

<pallas_src>
import functools

import jax
import jax.numpy as jnp
from jax.experimental import pallas as pl
from jax.experimental.pallas import tpu as pltpu

MATMUL_DTYPE = jnp.bfloat16      # native MXU operand dtype on v5e/v6e/v7x
_TILE_M_MAX = 1024               # patch rows per grid step
_VMEM_LIMIT = 48 * 1024 * 1024   # scoped VMEM cap (safe under v7x 64 MiB phys)
_BN_EPS = 1e-5


def _round_up(x, m):
    return (x + m - 1) // m * m


# ----------------------------------------------------------------------------
# Fused per-layer kernel: gated conv (one wide MXU matmul) + global BN stats
# + BatchNorm affine + ELU, all in one pallas_call.  The layer output block is
# VMEM-resident across the whole M sweep; BN+ELU is applied in place on the
# last grid step, so the gated-conv intermediate never touches HBM.
# ----------------------------------------------------------------------------
def _fused_layer_kernel(p_ref, w_ref, b_ref, gamma_ref, beta_ref,
                        o_ref, stats_ref,
                        *, c_out, m_valid, tile_m, num_tiles):
    i = pl.program_id(0)

    @pl.when(i == 0)
    def _init():
        stats_ref[...] = jnp.zeros_like(stats_ref)

    # One MXU matmul for conv and gate together: (tile_m, K) @ (K, 2*C_out),
    # bf16 operands, f32 accumulation.
    z = jnp.dot(p_ref[...], w_ref[...],
                preferred_element_type=jnp.float32) + b_ref[...]
    conv = z[:, :c_out]
    gate = jax.nn.sigmoid(z[:, c_out:])            # EUP transcendental path
    y = conv * gate

    # Per-channel sum / sum-of-squares for global BatchNorm statistics.
    # Rows >= m_valid are zero padding of the ragged last tile; mask them with
    # a (tile_m, 1) compare broadcast by the select.  Skip when not needed.
    if m_valid == tile_m * num_tiles:
        ym = y
    else:
        row = jax.lax.broadcasted_iota(jnp.int32, (tile_m, 1), 0) + i * tile_m
        ym = jnp.where(row < m_valid, y, 0.0)
    stats_ref[...] += jnp.concatenate(
        [jnp.sum(ym, axis=0, keepdims=True),
         jnp.sum(ym * ym, axis=0, keepdims=True)], axis=0)        # (2, C_out)

    # Stash the gated-conv tile in the VMEM-resident output block.
    if num_tiles == 1:
        o_ref[...] = y
    else:
        start = pl.multiple_of(i * tile_m, 8)
        o_ref[pl.ds(start, tile_m), :] = y

    # Last grid step: finish BN statistics and apply affine + ELU in place.
    @pl.when(i == num_tiles - 1)
    def _finalize():
        inv_m = 1.0 / m_valid
        stats = stats_ref[...]
        mean = stats[0:1, :] * inv_m
        var = jnp.maximum(stats[1:2, :] * inv_m - mean * mean, 0.0)
        scale = gamma_ref[...] * jax.lax.rsqrt(var + _BN_EPS)
        shift = beta_ref[...] - mean * scale
        for j in range(num_tiles):                 # static slices, short unroll
            blk = o_ref[j * tile_m:(j + 1) * tile_m, :]
            ybn = blk * scale + shift
            # ELU(1); clamp the exp argument so the unselected branch never
            # overflows.
            o_ref[j * tile_m:(j + 1) * tile_m, :] = jnp.where(
                ybn > 0.0, ybn, jnp.exp(jnp.minimum(ybn, 0.0)) - 1.0)


# ----------------------------------------------------------------------------
# Glue: im2col for kernel width 3, stride 2 (padding done by the caller)
# ----------------------------------------------------------------------------
def _im2col_w3_s2(x_nhwc):
    n, h, w, c = x_nhwc.shape
    w_out = (w - 3) // 2 + 1
    cols = [x_nhwc[:, :, k: k + 2 * w_out: 2, :] for k in range(3)]
    patches = jnp.stack(cols, axis=-1)                     # (N,H,Wo,C,3)
    return patches.reshape(n * h * w_out, c * 3), (n, h, w_out)
    # TODO(synk): fold the 3 tap-shifted reads into the kernel (shifted NHWC
    # BlockSpecs / strided pl.ds) to drop this slab from HBM entirely; with
    # bf16 patches it is already small at these problem sizes.


# ----------------------------------------------------------------------------
# One encoder stage (single fused pallas_call)
# ----------------------------------------------------------------------------
def _encoder_layer(x_nhwc, lp):
    if lp['pad']:   # Gate_Conv_padding: ConstantPad2d((1,1,0,0)) -> pad width
        x_nhwc = jnp.pad(x_nhwc, ((0, 0), (0, 0), (1, 1), (0, 0)))

    patches, (n, h, w_out) = _im2col_w3_s2(x_nhwc)
    m, k = patches.shape
    c_out = lp['c_out']

    tile_m = min(_TILE_M_MAX, _round_up(m, 8))
    m_pad = _round_up(m, tile_m)
    num_tiles = m_pad // tile_m

    # VMEM budget: resident f32 output + double-buffered bf16 patch tiles.
    assert m_pad * c_out * 4 + 4 * tile_m * k <= 40 * 1024 * 1024, (
        "layer too large for the VMEM-resident fused path")
    # TODO(synk): streamed two-pass variant (per-tile stats outputs, parallel
    # M axis) for inputs whose (m_pad, c_out) slab does not fit in VMEM.

    patches = jnp.pad(patches, ((0, m_pad - m), (0, 0))).astype(MATMUL_DTYPE)

    out = pl.pallas_call(
        functools.partial(_fused_layer_kernel, c_out=c_out, m_valid=m,
                          tile_m=tile_m, num_tiles=num_tiles),
        out_shape=jax.ShapeDtypeStruct((m_pad, c_out), jnp.float32),
        grid_spec=pltpu.PrefetchScalarGridSpec(
            num_scalar_prefetch=0,
            grid=(num_tiles,),
            in_specs=[pl.BlockSpec((tile_m, k), lambda i: (i, 0)),
                      pl.BlockSpec((k, 2 * c_out), lambda i: (0, 0)),
                      pl.BlockSpec((1, 2 * c_out), lambda i: (0, 0)),
                      pl.BlockSpec((1, c_out), lambda i: (0, 0)),
                      pl.BlockSpec((1, c_out), lambda i: (0, 0))],
            out_specs=pl.BlockSpec((m_pad, c_out), lambda i: (0, 0)),
            scratch_shapes=[pltpu.VMEM((2, c_out), jnp.float32)]),
        compiler_params=pltpu.CompilerParams(
            dimension_semantics=("arbitrary",),   # resident output + stats acc
            vmem_limit_bytes=_VMEM_LIMIT),
    )(patches, lp['w_fused'], lp['b_fused'], lp['gamma'], lp['beta'])

    return out[:m].reshape(n, h, w_out, c_out)


# ----------------------------------------------------------------------------
# One-time parameter preprocessing (hoisted out of the per-call path)
# ----------------------------------------------------------------------------
def prepare_params(params):
    prepped = []
    for lp in params:
        c_out, c_in, _, kw = lp['w_conv'].shape            # (Co, Ci, 1, 3)
        k = c_in * kw
        wc = lp['w_conv'].reshape(c_out, k).T
        wg = lp['w_gate'].reshape(c_out, k).T
        prepped.append(dict(
            pad=lp['pad'], c_out=int(c_out),
            # fused lane-dense (K, 2*C_out) bf16 MXU operand
            w_fused=jnp.concatenate([wc, wg], axis=1).astype(MATMUL_DTYPE),
            b_fused=jnp.concatenate([lp['b_conv'], lp['b_gate']]
                                    ).reshape(1, 2 * c_out).astype(jnp.float32),
            gamma=lp['gamma'].reshape(1, c_out).astype(jnp.float32),
            beta=lp['beta'].reshape(1, c_out).astype(jnp.float32)))
    return prepped


# ----------------------------------------------------------------------------
# Encoder forward (Pallas)
# ----------------------------------------------------------------------------
def encoder_forward(x_nchw, prepped_params):
    x = jnp.transpose(x_nchw, (0, 2, 3, 1)).astype(jnp.float32)   # NHWC once
    feats = []
    for lp in prepped_params:
        x = _encoder_layer(x, lp)
        feats.append(x)                       # stay NHWC inside the loop
    # single layout conversion per skip output, at the module boundary only
    x_list = [jnp.transpose(f, (0, 3, 1, 2)) for f in feats]
    return x_list[-1], x_list


# ----------------------------------------------------------------------------
# Pure-JAX reference for one stage (PyTorch semantics).  Conv operands are
# quantized to bf16 exactly like the kernel's MXU operands so the check stays
# tight; everything else runs in f32.
# ----------------------------------------------------------------------------
def _q_bf16(a):
    return a.astype(jnp.bfloat16).astype(jnp.float32)


def encoder_layer_ref(x_nchw, lp):
    pad = ((0, 0), (1, 1)) if lp['pad'] else ((0, 0), (0, 0))
    xq = _q_bf16(x_nchw.astype(jnp.float32))

    def conv(w, b):
        y = jax.lax.conv_general_dilated(
            xq, _q_bf16(w), window_strides=(1, 2), padding=pad,
            dimension_numbers=('NCHW', 'OIHW', 'NCHW'),
            precision=jax.lax.Precision.HIGHEST)
        return y + b.reshape(1, -1, 1, 1)

    c = conv(lp['w_conv'], lp['b_conv'])
    g = jax.nn.sigmoid(conv(lp['w_gate'], lp['b_gate']))
    y = c * g
    mean = jnp.mean(y, axis=(0, 2, 3), keepdims=True)
    var = jnp.mean((y - mean) ** 2, axis=(0, 2, 3), keepdims=True)
    ybn = ((y - mean) * jax.lax.rsqrt(var + _BN_EPS)
           * lp['gamma'].reshape(1, -1, 1, 1) + lp['beta'].reshape(1, -1, 1, 1))
    return jnp.where(ybn > 0, ybn, jnp.exp(jnp.minimum(ybn, 0.0)) - 1.0)


# ----------------------------------------------------------------------------
if __name__ == "__main__":
    key = jax.random.PRNGKey(0)

    # Encoder stage config (matches the PyTorch __init__)
    in_ch  = [2, 64, 64, 64, 64, 64, 128]
    out_ch = [64, 64, 64, 64, 64, 128, 256]
    pads   = [False, False, False, False, False, True, True]

    params = []
    for ci, co, pd in zip(in_ch, out_ch, pads):
        key, k1, k2, k3, k4, k5, k6 = jax.random.split(key, 7)
        bound = 1.0 / (ci * 3.0) ** 0.5
        params.append(dict(
            pad=pd,
            w_conv=jax.random.uniform(k1, (co, ci, 1, 3), jnp.float32, -bound, bound),
            b_conv=jax.random.uniform(k2, (co,), jnp.float32, -bound, bound),
            w_gate=jax.random.uniform(k3, (co, ci, 1, 3), jnp.float32, -bound, bound),
            b_gate=jax.random.uniform(k4, (co,), jnp.float32, -bound, bound),
            gamma=1.0 + 0.1 * jax.random.normal(k5, (co,), jnp.float32),
            beta=0.1 * jax.random.normal(k6, (co,), jnp.float32),
        ))

    # Small input: (N=2, C=2, H=4, W=64); width must survive 7 stride-2 stages.
    key, kx = jax.random.split(key)
    x = jax.random.normal(kx, (2, 2, 4, 64), dtype=jnp.float32)

    prepped = prepare_params(params)
    out, x_list = encoder_forward(x, prepped)
    out = jax.block_until_ready(out)
    assert out.shape == (2, 256, 4, 1), out.shape

    # Layer-by-layer check: feed each reference stage the kernel's previous
    # layer output so both sides see identical (bf16-quantized) conv operands,
    # keeping the tolerance tight despite bf16 MXU inputs.
    inp = x
    for li, (lp_raw, got) in enumerate(zip(params, x_list)):
        ref = encoder_layer_ref(inp, lp_raw)
        assert got.shape == ref.shape, (li, got.shape, ref.shape)
        err = float(jnp.max(jnp.abs(got - ref)))
        assert err < 2e-2, f"layer {li}: max abs err {err}"
        inp = got

    print("KERNEL_OK")
</pallas_src>

<mosaic_0001>
module attributes {stable_mosaic.version = 11 : i64} {
  func.func @_fused_layer_kernel(%arg0: i32, %arg1: memref<248x6xbf16, #tpu.memory_space<vmem>>, %arg2: memref<6x128xbf16, #tpu.memory_space<vmem>>, %arg3: memref<1x128xf32, #tpu.memory_space<vmem>>, %arg4: memref<1x64xf32, #tpu.memory_space<vmem>>, %arg5: memref<1x64xf32, #tpu.memory_space<vmem>>, %arg6: memref<248x64xf32, #tpu.memory_space<vmem>>, %arg7: memref<2x64xf32, #tpu.memory_space<vmem>>) attributes {dimension_semantics = [#tpu.dimension_semantics<arbitrary>], iteration_bounds = array<i64: 1>, scalar_prefetch = 0 : i64, scratch_operands = 1 : i64, tpu.core_type = #tpu.core_type<tc>, window_params = [{transform_indices = @transform_0, window_bounds = array<i64: 248, 6>}, {pipeline_mode = #tpu.pipeline_mode<synchronous>, transform_indices = @transform_1, window_bounds = array<i64: 6, 128>}, {pipeline_mode = #tpu.pipeline_mode<synchronous>, transform_indices = @transform_2, window_bounds = array<i64: 1, 128>}, {pipeline_mode = #tpu.pipeline_mode<synchronous>, transform_indices = @transform_3, window_bounds = array<i64: 1, 64>}, {pipeline_mode = #tpu.pipeline_mode<synchronous>, transform_indices = @transform_4, window_bounds = array<i64: 1, 64>}, {pipeline_mode = #tpu.pipeline_mode<synchronous>, transform_indices = @transform_5, window_bounds = array<i64: 248, 64>}]} {
    %c0_i32 = arith.constant 0 : i32
    %0 = arith.cmpi eq, %arg0, %c0_i32 : i32
    %1 = arith.extui %0 : i1 to i32
    %c0_i32_0 = arith.constant 0 : i32
    %2 = arith.cmpi ne, %1, %c0_i32_0 : i32
    scf.if %2 {
      %cst_17 = arith.constant 0.000000e+00 : f32
      %30 = vector.broadcast %cst_17 : f32 to vector<2x64xf32>
      %c0_18 = arith.constant 0 : index
      %c0_19 = arith.constant 0 : index
      %31 = vector.load %arg7[%c0_18, %c0_19] : memref<2x64xf32, #tpu.memory_space<vmem>>, vector<2x64xf32>
      tpu.vector_store %arg7[%c0_18, %c0_19], %30 {strides = array<i32>} : memref<2x64xf32, #tpu.memory_space<vmem>>, vector<2x64xf32>,
    } else {
    }
    %c0 = arith.constant 0 : index
    %c0_1 = arith.constant 0 : index
    %3 = vector.load %arg1[%c0, %c0_1] : memref<248x6xbf16, #tpu.memory_space<vmem>>, vector<248x6xbf16>
    %c0_2 = arith.constant 0 : index
    %c0_3 = arith.constant 0 : index
    %4 = vector.load %arg2[%c0_2, %c0_3] : memref<6x128xbf16, #tpu.memory_space<vmem>>, vector<6x128xbf16>
    %cst = arith.constant dense<0.000000e+00> : vector<248x128xf32>
    %5 = tpu.matmul %3, %4, %cst {dimension_numbers = #tpu.dot_dimension_numbers<[1], [0], [0], [1], [0, 0, 1, 1], [], []>} : vector<248x6xbf16>, vector<6x128xbf16>, vector<248x128xf32> -> vector<248x128xf32>
    %c0_4 = arith.constant 0 : index
    %c0_5 = arith.constant 0 : index
    %6 = vector.load %arg3[%c0_4, %c0_5] : memref<1x128xf32, #tpu.memory_space<vmem>>, vector<1x128xf32>
    %7 = vector.broadcast %6 : vector<1x128xf32> to vector<248x128xf32>
    %8 = arith.addf %5, %7 : vector<248x128xf32>
    %9 = vector.extract_strided_slice %8 {offsets = [0, 0], sizes = [248, 64], strides = [1, 1]} : vector<248x128xf32> to vector<248x64xf32>
    %10 = vector.extract_strided_slice %8 {offsets = [0, 64], sizes = [248, 64], strides = [1, 1]} : vector<248x128xf32> to vector<248x64xf32>
    %11 = arith.negf %10 : vector<248x64xf32>
    %12 = math.exp %11 : vector<248x64xf32>
    %cst_6 = arith.constant 1.000000e+00 : f32
    %13 = vector.broadcast %cst_6 : f32 to vector<248x64xf32>
    %14 = arith.addf %13, %12 : vector<248x64xf32>
    %15 = arith.divf %13, %14 : vector<248x64xf32>
    %16 = arith.mulf %9, %15 : vector<248x64xf32>
    %c0_7 = arith.constant 0 : index
    %c0_8 = arith.constant 0 : index
    %17 = vector.load %arg7[%c0_7, %c0_8] : memref<2x64xf32, #tpu.memory_space<vmem>>, vector<2x64xf32>
    %cst_9 = arith.constant dense<0.000000e+00> : vector<64xf32>
    %18 = vector.multi_reduction <add>, %16, %cst_9 [0] : vector<248x64xf32> to vector<64xf32>
    %19 = vector.shape_cast %18 : vector<64xf32> to vector<1x64xf32>
    %20 = arith.mulf %16, %16 : vector<248x64xf32>
    %cst_10 = arith.constant dense<0.000000e+00> : vector<64xf32>
    %21 = vector.multi_reduction <add>, %20, %cst_10 [0] : vector<248x64xf32> to vector<64xf32>
    %22 = vector.shape_cast %21 : vector<64xf32> to vector<1x64xf32>
    %23 = tpu.concatenate %19, %22 in 0 : vector<1x64xf32>, vector<1x64xf32> -> vector<2x64xf32>
    %24 = arith.addf %17, %23 : vector<2x64xf32>
    %c0_11 = arith.constant 0 : index
    %c0_12 = arith.constant 0 : index
    %25 = vector.load %arg7[%c0_11, %c0_12] : memref<2x64xf32, #tpu.memory_space<vmem>>, vector<2x64xf32>
    tpu.vector_store %arg7[%c0_11, %c0_12], %24 {strides = array<i32>} : memref<2x64xf32, #tpu.memory_space<vmem>>, vector<2x64xf32>,
    %c0_13 = arith.constant 0 : index
    %c0_14 = arith.constant 0 : index
    %26 = vector.load %arg6[%c0_13, %c0_14] : memref<248x64xf32, #tpu.memory_space<vmem>>, vector<248x64xf32>
    tpu.vector_store %arg6[%c0_13, %c0_14], %16 {strides = array<i32>} : memref<248x64xf32, #tpu.memory_space<vmem>>, vector<248x64xf32>,
    %c0_i32_15 = arith.constant 0 : i32
    %27 = arith.cmpi eq, %arg0, %c0_i32_15 : i32
    %28 = arith.extui %27 : i1 to i32
    %c0_i32_16 = arith.constant 0 : i32
    %29 = arith.cmpi ne, %28, %c0_i32_16 : i32
    scf.if %29 {
      %c0_17 = arith.constant 0 : index
      %c0_18 = arith.constant 0 : index
      %30 = vector.load %arg7[%c0_17, %c0_18] : memref<2x64xf32, #tpu.memory_space<vmem>>, vector<2x64xf32>
      %31 = vector.extract_strided_slice %30 {offsets = [0, 0], sizes = [1, 64], strides = [1, 1]} : vector<2x64xf32> to vector<1x64xf32>
      %cst_19 = arith.constant 0.00403225794 : f32
      %32 = vector.broadcast %cst_19 : f32 to vector<1x64xf32>
      %33 = arith.mulf %31, %32 : vector<1x64xf32>
      %34 = vector.extract_strided_slice %30 {offsets = [1, 0], sizes = [1, 64], strides = [1, 1]} : vector<2x64xf32> to vector<1x64xf32>
      %cst_20 = arith.constant 0.00403225794 : f32
      %35 = vector.broadcast %cst_20 : f32 to vector<1x64xf32>
      %36 = arith.mulf %34, %35 : vector<1x64xf32>
      %37 = arith.mulf %33, %33 : vector<1x64xf32>
      %38 = arith.subf %36, %37 : vector<1x64xf32>
      %cst_21 = arith.constant 0.000000e+00 : f32
      %39 = vector.broadcast %cst_21 : f32 to vector<1x64xf32>
      %40 = arith.maximumf %38, %39 : vector<1x64xf32>
      %c0_22 = arith.constant 0 : index
      %c0_23 = arith.constant 0 : index
      %41 = vector.load %arg4[%c0_22, %c0_23] : memref<1x64xf32, #tpu.memory_space<vmem>>, vector<1x64xf32>
      %cst_24 = arith.constant 9.99999974E-6 : f32
      %42 = vector.broadcast %cst_24 : f32 to vector<1x64xf32>
      %43 = arith.addf %40, %42 : vector<1x64xf32>
      %44 = math.rsqrt %43 : vector<1x64xf32>
      %45 = arith.mulf %41, %44 : vector<1x64xf32>
      %c0_25 = arith.constant 0 : index
      %c0_26 = arith.constant 0 : index
      %46 = vector.load %arg5[%c0_25, %c0_26] : memref<1x64xf32, #tpu.memory_space<vmem>>, vector<1x64xf32>
      %47 = arith.mulf %33, %45 : vector<1x64xf32>
      %48 = arith.subf %46, %47 : vector<1x64xf32>
      %c0_27 = arith.constant 0 : index
      %c0_28 = arith.constant 0 : index
      %49 = vector.load %arg6[%c0_27, %c0_28] : memref<248x64xf32, #tpu.memory_space<vmem>>, vector<248x64xf32>
      %50 = vector.broadcast %45 : vector<1x64xf32> to vector<248x64xf32>
      %51 = arith.mulf %49, %50 : vector<248x64xf32>
      %52 = vector.broadcast %48 : vector<1x64xf32> to vector<248x64xf32>
      %53 = arith.addf %51, %52 : vector<248x64xf32>
      %cst_29 = arith.constant 0.000000e+00 : f32
      %54 = vector.broadcast %cst_29 : f32 to vector<248x64xf32>
      %55 = arith.cmpf ogt, %53, %54 : vector<248x64xf32>
      %cst_30 = arith.constant 0.000000e+00 : f32
      %56 = vector.broadcast %cst_30 : f32 to vector<248x64xf32>
      %57 = arith.minimumf %53, %56 : vector<248x64xf32>
      %58 = math.exp %57 : vector<248x64xf32>
      %cst_31 = arith.constant 1.000000e+00 : f32
      %59 = vector.broadcast %cst_31 : f32 to vector<248x64xf32>
      %60 = arith.subf %58, %59 : vector<248x64xf32>
      %61 = arith.select %55, %53, %60 : vector<248x64xi1>, vector<248x64xf32>
      %c0_32 = arith.constant 0 : index
      %c0_33 = arith.constant 0 : index
      %62 = vector.load %arg6[%c0_32, %c0_33] : memref<248x64xf32, #tpu.memory_space<vmem>>, vector<248x64xf32>
      tpu.vector_store %arg6[%c0_32, %c0_33], %61 {strides = array<i32>} : memref<248x64xf32, #tpu.memory_space<vmem>>, vector<248x64xf32>,
    } else {
    }
    return
  }
  func.func @transform_0(%arg0: i32) -> (i32, i32) {
    %c0_i32 = arith.constant 0 : i32
    %c0_i32_0 = arith.constant 0 : i32
    return %arg0, %c0_i32 : i32, i32
  }
  func.func @transform_1(%arg0: i32) -> (i32, i32) {
    %c0_i32 = arith.constant 0 : i32
    %c0_i32_0 = arith.constant 0 : i32
    %c0_i32_1 = arith.constant 0 : i32
    return %c0_i32, %c0_i32_0 : i32, i32
  }
  func.func @transform_2(%arg0: i32) -> (i32, i32) {
    %c0_i32 = arith.constant 0 : i32
    %c0_i32_0 = arith.constant 0 : i32
    %c0_i32_1 = arith.constant 0 : i32
    return %c0_i32, %c0_i32_0 : i32, i32
  }
  func.func @transform_3(%arg0: i32) -> (i32, i32) {
    %c0_i32 = arith.constant 0 : i32
    %c0_i32_0 = arith.constant 0 : i32
    %c0_i32_1 = arith.constant 0 : i32
    return %c0_i32, %c0_i32_0 : i32, i32
  }
  func.func @transform_4(%arg0: i32) -> (i32, i32) {
    %c0_i32 = arith.constant 0 : i32
    %c0_i32_0 = arith.constant 0 : i32
    %c0_i32_1 = arith.constant 0 : i32
    return %c0_i32, %c0_i32_0 : i32, i32
  }
  func.func @transform_5(%arg0: i32) -> (i32, i32) {
    %c0_i32 = arith.constant 0 : i32
    %c0_i32_0 = arith.constant 0 : i32
    %c0_i32_1 = arith.constant 0 : i32
    return %c0_i32, %c0_i32_0 : i32, i32
  }
}

</mosaic_0001>

<llo_original>
// kernel: tpu_custom_call.1
$region0: #{tpu_custom_call.1}
  #allocation0 [shape = 'u32[]', space=smem, size = 0x4, offset = 0x4, fixed_abs, tag = 'smem constant byte address 0x4 - core index']
  #allocation1 [shape = 'u32[144,128]{1,0:T(1,128)}', space=vmem, size = 0x12000, scoped, tag = 'internal scratch']
  #allocation2 [shape = 'f32[2,64]{1,0:T(2,128)}', space=vmem, size = 0x400, scoped, tag = 'scratch operand']
  %s0 = inlined_call_operand.vmem [shape: bf16[248,6], index: 0, kind: input, shape index: {}]
  %s1 = inlined_call_operand.vmem [shape: bf16[6,128], index: 1, kind: input, shape index: {}]
  %s2 = inlined_call_operand.vmem [shape: f32[1,128], index: 2, kind: input, shape index: {}]
  %s3 = inlined_call_operand.vmem [shape: f32[1,64], index: 3, kind: input, shape index: {}]
  %s4 = inlined_call_operand.vmem [shape: f32[1,64], index: 4, kind: input, shape index: {}]
  %s5 = inlined_call_operand.vmem [shape: f32[248,64], index: 5, kind: output, shape index: {}]
  %s6 = sld [smem:[#allocation0]]
  $region38: #{tpu_custom_call.1} parent=0
    _
  %s8 = ssub.s32 1, %s6
  %s9 = scalar_select 0, %s8, %s6
  // Predicated region
  $region2: #{tpu_custom_call.1} parent=0 // pred_check
    _
  $region3: #{tpu_custom_call.1} parent=0 // pred_check_branch
    %11 = sbr.rel (0) target = $region5
  $region4: #{tpu_custom_call.1} parent=0 // pred_region
    _
  $region5: #{tpu_custom_call.1} parent=0 // pred_fallthru
    _
  // Predicated region
  $region6: #{tpu_custom_call.1} parent=0 // pred_check
    _
  $region7: #{tpu_custom_call.1} parent=0 // pred_check_branch
    %13 = sbr.rel (0) target = $region9
  $region8: #{tpu_custom_call.1} parent=0 // pred_region
    _
  $region9: #{tpu_custom_call.1} parent=0 // pred_fallthru
    _
  // Predicated region
  $region10: #{tpu_custom_call.1} parent=0 // pred_check
    _
  $region11: #{tpu_custom_call.1} parent=0 // pred_check_branch
    %15 = sbr.rel (0) target = $region13
  $region12: #{tpu_custom_call.1} parent=0 // pred_region
    _
  $region13: #{tpu_custom_call.1} parent=0 // pred_fallthru
    _
  // Predicated region
  $region14: #{tpu_custom_call.1} parent=0 // pred_check
    _
  $region15: #{tpu_custom_call.1} parent=0 // pred_check_branch
    %17 = sbr.rel (0) target = $region17
  $region16: #{tpu_custom_call.1} parent=0 // pred_region
    _
  $region17: #{tpu_custom_call.1} parent=0 // pred_fallthru
    _
  // Predicated region
  $region18: #{tpu_custom_call.1} parent=0 // pred_check
    _
  $region19: #{tpu_custom_call.1} parent=0 // pred_check_branch
    %19 = sbr.rel (0) target = $region21
  $region20: #{tpu_custom_call.1} parent=0 // pred_region
    _
  $region21: #{tpu_custom_call.1} parent=0 // pred_fallthru
    _
  %p21 = scmp.eq.s32.totalorder 0, 0
  // Predicated region
  $region22: #{tpu_custom_call.1} parent=0 // pred_check
    %p22 = pneg %p21
  $region23: #{tpu_custom_call.1} parent=0 // pred_check_branch
    %24 = sbr.rel (%p22) target = $region25
  $region24: #{tpu_custom_call.1} parent=0 // pred_region
    %vm25 = vcmask 517120
    %26 = vst.msk [vmem:[#allocation2] sm:$0x3] %vm25, 0.0
  $region25: #{tpu_custom_call.1} parent=0 // pred_fallthru
    _
  %v27 = vld [vmem:[%s0] sm:$0xf]
  %v28 = vld [vmem:[%s0 + $0x4] sm:$0xf]
  %v29 = vld [vmem:[%s0 + $0x8] sm:$0xf]
  %v30 = vld [vmem:[%s0 + $0xc] sm:$0xf]
  %v31 = vld [vmem:[%s0 + $0x10] sm:$0xf]
  %v32 = vld [vmem:[%s0 + $0x14] sm:$0xf]
  %v33 = vld [vmem:[%s0 + $0x18] sm:$0xf]
  %v34 = vld [vmem:[%s0 + $0x1c] sm:$0xf]
  %v35 = vld [vmem:[%s0 + $0x20] sm:$0xf]
  %v36 = vld [vmem:[%s0 + $0x24] sm:$0xf]
  %v37 = vld [vmem:[%s0 + $0x28] sm:$0xf]
  %v38 = vld [vmem:[%s0 + $0x2c] sm:$0xf]
  %v39 = vld [vmem:[%s0 + $0x30] sm:$0xf]
  %v40 = vld [vmem:[%s0 + $0x34] sm:$0xf]
  %v41 = vld [vmem:[%s0 + $0x38] sm:$0xf]
  %v42 = vld [vmem:[%s0 + $0x3c] sm:$0xf]
  %v43 = vld [vmem:[%s0 + $0x40] sm:$0xf]
  %v44 = vld [vmem:[%s0 + $0x44] sm:$0xf]
  %v45 = vld [vmem:[%s0 + $0x48] sm:$0xf]
  %v46 = vld [vmem:[%s0 + $0x4c] sm:$0xf]
  %v47 = vld [vmem:[%s0 + $0x50] sm:$0xf]
  %v48 = vld [vmem:[%s0 + $0x54] sm:$0xf]
  %v49 = vld [vmem:[%s0 + $0x58] sm:$0xf]
  %v50 = vld [vmem:[%s0 + $0x5c] sm:$0xf]
  %v51 = vld [vmem:[%s0 + $0x60] sm:$0xf]
  %v52 = vld [vmem:[%s0 + $0x64] sm:$0xf]
  %v53 = vld [vmem:[%s0 + $0x68] sm:$0xf]
  %v54 = vld [vmem:[%s0 + $0x6c] sm:$0xf]
  %v55 = vld [vmem:[%s0 + $0x70] sm:$0xf]
  %v56 = vld [vmem:[%s0 + $0x74] sm:$0xf]
  %v57 = vld [vmem:[%s0 + $0x78] sm:$0xf]
  %v58 = vld [vmem:[%s1] sm:$0x7]
  %v59 = vld [vmem:[%s2] sm:$0x1]
  %v61 = vlaneseq
  %v62 = vshrl.u32 %v61, 7
  %v63 = vsub.s32 0, %v62
  %v64 = vrot.slane %v59, %v63
  %v97 = vunpack.c.l.b16 %v27
  %v98 = vunpack.c.l.b16 %v28
  %v99 = vunpack.c.l.b16 %v29
  %v100 = vunpack.c.l.b16 %v30
  %v101 = vunpack.c.l.b16 %v31
  %v102 = vunpack.c.l.b16 %v32
  %v103 = vunpack.c.l.b16 %v33
  %v104 = vunpack.c.l.b16 %v34
  %v105 = vunpack.c.l.b16 %v35
  %v106 = vunpack.c.l.b16 %v36
  %v107 = vunpack.c.l.b16 %v37
  %v108 = vunpack.c.l.b16 %v38
  %v109 = vunpack.c.l.b16 %v39
  %v110 = vunpack.c.l.b16 %v40
  %v111 = vunpack.c.l.b16 %v41
  %v112 = vunpack.c.l.b16 %v42
  %v113 = vunpack.c.l.b16 %v43
  %v114 = vunpack.c.l.b16 %v44
  %v115 = vunpack.c.l.b16 %v45
  %v116 = vunpack.c.l.b16 %v46
  %v117 = vunpack.c.l.b16 %v47
  %v118 = vunpack.c.l.b16 %v48
  %v119 = vunpack.c.l.b16 %v49
  %v120 = vunpack.c.l.b16 %v50
  %v121 = vunpack.c.l.b16 %v51
  %v122 = vunpack.c.l.b16 %v52
  %v123 = vunpack.c.l.b16 %v53
  %v124 = vunpack.c.l.b16 %v54
  %v125 = vunpack.c.l.b16 %v55
  %v126 = vunpack.c.l.b16 %v56
  %v127 = vunpack.c.l.b16 %v57
  %v128 = vpack.c.b16 %v98, %v97
  %v129 = vpack.c.b16 %v100, %v99
  %v130 = vpack.c.b16 %v102, %v101
  %v131 = vpack.c.b16 %v104, %v103
  %v132 = vpack.c.b16 %v106, %v105
  %v133 = vpack.c.b16 %v108, %v107
  %v134 = vpack.c.b16 %v110, %v109
  %v135 = vpack.c.b16 %v112, %v111
  %v136 = vpack.c.b16 %v114, %v113
  %v137 = vpack.c.b16 %v116, %v115
  %v138 = vpack.c.b16 %v118, %v117
  %v139 = vpack.c.b16 %v120, %v119
  %v140 = vpack.c.b16 %v122, %v121
  %v141 = vpack.c.b16 %v124, %v123
  %v142 = vpack.c.b16 %v126, %v125
  %v143 = vpack.c.b16 %v127, %v127
  %vm144 = vcmask 48128
  %v146 = vsel %vm144, %v128, 0
  %v149 = vsel %vm144, %v129, 0
  %v152 = vsel %vm144, %v130, 0
  %v155 = vsel %vm144, %v131, 0
  %v158 = vsel %vm144, %v132, 0
  %v161 = vsel %vm144, %v133, 0
  %v164 = vsel %vm144, %v134, 0
  %v167 = vsel %vm144, %v135, 0
  %v170 = vsel %vm144, %v136, 0
  %v173 = vsel %vm144, %v137, 0
  %v176 = vsel %vm144, %v138, 0
  %v179 = vsel %vm144, %v139, 0
  %v182 = vsel %vm144, %v140, 0
  %v185 = vsel %vm144, %v141, 0
  %v188 = vsel %vm144, %v142, 0
  %v191 = vsel %vm144, %v143, 0
  %vm193 = vcmask 1042432
  %v195 = vsel %vm193, %v58, 0
  %197 = vmatprep.subr.bf16.mxu0 0
  %198 = vmatpush1.bf16.msra.mxu0 %v195
  %199 = vmatprep.subr.bf16.mxu0 0
  %200 = vmatpush1.bf16.msra.mxu0 0
  %201 = vmatprep.subr.bf16.mxu0 0
  %202 = vmatpush1.bf16.msra.mxu0 0
  %203 = vmatprep.subr.bf16.mxu0 0
  %204 = vmatpush1.bf16.msra.mxu0 0
  %205 = vmatprep.subr.bf16.mxu0 0
  %206 = vmatpush1.bf16.msra.mxu0 0
  %207 = vmatprep.subr.bf16.mxu0 0
  %208 = vmatpush1.bf16.msra.mxu0 0
  %209 = vmatprep.subr.bf16.mxu0 0
  %210 = vmatpush1.bf16.msra.mxu0 0
  %211 = vmatprep.subr.bf16.mxu0 0
  %212 = vmatpush1.bf16.msra.mxu0 0
  %213 = vmatprep.subr.bf16.mxu0 0
  %214 = vmatpush1.bf16.msra.mxu0 0
  %215 = vmatprep.subr.bf16.mxu0 0
  %216 = vmatpush1.bf16.msra.mxu0 0
  %217 = vmatprep.subr.bf16.mxu0 0
  %218 = vmatpush1.bf16.msra.mxu0 0
  %219 = vmatprep.subr.bf16.mxu0 0
  %220 = vmatpush1.bf16.msra.mxu0 0
  %221 = vmatprep.subr.bf16.mxu0 0
  %222 = vmatpush1.bf16.msra.mxu0 0
  %223 = vmatprep.subr.bf16.mxu0 0
  %224 = vmatpush1.bf16.msra.mxu0 0
  %225 = vmatprep.subr.bf16.mxu0 0
  %226 = vmatpush1.bf16.msra.mxu0 0
  %227 = vmatprep.subr.bf16.mxu0 0
  %228 = vmatpush1.bf16.msra.mxu0 0
  %229 = vmatprep.mubr.bf16.mxu0 0
  %230 = vmatmul.mubr.bf16.gmra.mrb[0].mxu0 %v146
  %v231 = vpop.f32.mrb[0].mxu0
  %v232 = vadd.f32 %v64, %v231
  %v233 = vpop.f32.mrb[0].mxu0
  %v234 = vpop.f32.mrb[0].mxu0
  %v235 = vadd.f32 %v64, %v234
  %v236 = vpop.f32.mrb[0].mxu0
  %237 = vmatprep.mubr.bf16.mxu0 0
  %238 = vmatmul.mubr.bf16.gmra.mrb[0].mxu0 %v149
  %v239 = vpop.f32.mrb[0].mxu0
  %v240 = vadd.f32 %v64, %v239
  %v241 = vpop.f32.mrb[0].mxu0
  %v242 = vpop.f32.mrb[0].mxu0
  %v243 = vadd.f32 %v64, %v242
  %v244 = vpop.f32.mrb[0].mxu0
  %245 = vmatprep.mubr.bf16.mxu0 0
  %246 = vmatmul.mubr.bf16.gmra.mrb[0].mxu0 %v152
  %v247 = vpop.f32.mrb[0].mxu0
  %v248 = vadd.f32 %v64, %v247
  %v249 = vpop.f32.mrb[0].mxu0
  %v250 = vpop.f32.mrb[0].mxu0
  %v251 = vadd.f32 %v64, %v250
  %v252 = vpop.f32.mrb[0].mxu0
  %253 = vmatprep.mubr.bf16.mxu0 0
  %254 = vmatmul.mubr.bf16.gmra.mrb[0].mxu0 %v155
  %v255 = vpop.f32.mrb[0].mxu0
  %v256 = vadd.f32 %v64, %v255
  %v257 = vpop.f32.mrb[0].mxu0
  %v258 = vpop.f32.mrb[0].mxu0
  %v259 = vadd.f32 %v64, %v258
  %v260 = vpop.f32.mrb[0].mxu0
  %261 = vmatprep.mubr.bf16.mxu0 0
  %262 = vmatmul.mubr.bf16.gmra.mrb[0].mxu0 %v158
  %v263 = vpop.f32.mrb[0].mxu0
  %v264 = vadd.f32 %v64, %v263
  %v265 = vpop.f32.mrb[0].mxu0
  %v266 = vpop.f32.mrb[0].mxu0
  %v267 = vadd.f32 %v64, %v266
  %v268 = vpop.f32.mrb[0].mxu0
  %269 = vmatprep.mubr.bf16.mxu0 0
  %270 = vmatmul.mubr.bf16.gmra.mrb[0].mxu0 %v161
  %v271 = vpop.f32.mrb[0].mxu0
  %v272 = vadd.f32 %v64, %v271
  %v273 = vpop.f32.mrb[0].mxu0
  %v274 = vpop.f32.mrb[0].mxu0
  %v275 = vadd.f32 %v64, %v274
  %v276 = vpop.f32.mrb[0].mxu0
  %277 = vmatprep.mubr.bf16.mxu0 0
  %278 = vmatmul.mubr.bf16.gmra.mrb[0].mxu0 %v164
  %v279 = vpop.f32.mrb[0].mxu0
  %v280 = vadd.f32 %v64, %v279
  %v281 = vpop.f32.mrb[0].mxu0
  %v282 = vpop.f32.mrb[0].mxu0
  %v283 = vadd.f32 %v64, %v282
  %v284 = vpop.f32.mrb[0].mxu0
  %285 = vmatprep.mubr.bf16.mxu0 0
  %286 = vmatmul.mubr.bf16.gmra.mrb[0].mxu0 %v167
  %v287 = vpop.f32.mrb[0].mxu0
  %v288 = vadd.f32 %v64, %v287
  %v289 = vpop.f32.mrb[0].mxu0
  %v290 = vpop.f32.mrb[0].mxu0
  %v291 = vadd.f32 %v64, %v290
  %v292 = vpop.f32.mrb[0].mxu0
  %293 = vmatprep.mubr.bf16.mxu0 0
  %294 = vmatmul.mubr.bf16.gmra.mrb[0].mxu0 %v170
  %v295 = vpop.f32.mrb[0].mxu0
  %v296 = vadd.f32 %v64, %v295
  %v297 = vpop.f32.mrb[0].mxu0
  %v298 = vpop.f32.mrb[0].mxu0
  %v299 = vadd.f32 %v64, %v298
  %v300 = vpop.f32.mrb[0].mxu0
  %301 = vmatprep.mubr.bf16.mxu0 0
  %302 = vmatmul.mubr.bf16.gmra.mrb[0].mxu0 %v173
  %v303 = vpop.f32.mrb[0].mxu0
  %v304 = vadd.f32 %v64, %v303
  %v305 = vpop.f32.mrb[0].mxu0
  %v306 = vpop.f32.mrb[0].mxu0
  %v307 = vadd.f32 %v64, %v306
  %v308 = vpop.f32.mrb[0].mxu0
  %309 = vmatprep.mubr.bf16.mxu0 0
  %310 = vmatmul.mubr.bf16.gmra.mrb[0].mxu0 %v176
  %v311 = vpop.f32.mrb[0].mxu0
  %v312 = vadd.f32 %v64, %v311
  %v313 = vpop.f32.mrb[0].mxu0
  %v314 = vpop.f32.mrb[0].mxu0
  %v315 = vadd.f32 %v64, %v314
  %v316 = vpop.f32.mrb[0].mxu0
  %317 = vmatprep.mubr.bf16.mxu0 0
  %318 = vmatmul.mubr.bf16.gmra.mrb[0].mxu0 %v179
  %v319 = vpop.f32.mrb[0].mxu0
  %v320 = vadd.f32 %v64, %v319
  %v321 = vpop.f32.mrb[0].mxu0
  %v322 = vpop.f32.mrb[0].mxu0
  %v323 = vadd.f32 %v64, %v322
  %v324 = vpop.f32.mrb[0].mxu0
  %325 = vmatprep.mubr.bf16.mxu0 0
  %326 = vmatmul.mubr.bf16.gmra.mrb[0].mxu0 %v182
  %v327 = vpop.f32.mrb[0].mxu0
  %v328 = vadd.f32 %v64, %v327
  %v329 = vpop.f32.mrb[0].mxu0
  %v330 = vpop.f32.mrb[0].mxu0
  %v331 = vadd.f32 %v64, %v330
  %v332 = vpop.f32.mrb[0].mxu0
  %333 = vmatprep.mubr.bf16.mxu0 0
  %334 = vmatmul.mubr.bf16.gmra.mrb[0].mxu0 %v185
  %v335 = vpop.f32.mrb[0].mxu0
  %v336 = vadd.f32 %v64, %v335
  %v337 = vpop.f32.mrb[0].mxu0
  %v338 = vpop.f32.mrb[0].mxu0
  %v339 = vadd.f32 %v64, %v338
  %v340 = vpop.f32.mrb[0].mxu0
  %341 = vmatprep.mubr.bf16.mxu0 0
  %342 = vmatmul.mubr.bf16.gmra.mrb[0].mxu0 %v188
  %v343 = vpop.f32.mrb[0].mxu0
  %v344 = vadd.f32 %v64, %v343
  %v345 = vpop.f32.mrb[0].mxu0
  %v346 = vpop.f32.mrb[0].mxu0
  %v347 = vadd.f32 %v64, %v346
  %v348 = vpop.f32.mrb[0].mxu0
  %349 = vmatprep.mubr.bf16.mxu0 0
  %350 = vmatmul.mubr.bf16.gmra.mrb[0].mxu0 %v191
  %v351 = vpop.f32.mrb[0].mxu0
  %v352 = vadd.f32 %v64, %v351
  %v353 = vpop.f32.mrb[0].mxu0
  %v354 = vpop.f32.mrb[0].mxu0
  %v355 = vpop.f32.mrb[0].mxu0
  %356 = vdwg.mxu0
  %v357 = vxor.u32 %v232, 2147483648
  %v358 = vxor.u32 %v235, 2147483648
  %v359 = vxor.u32 %v240, 2147483648
  %v360 = vxor.u32 %v243, 2147483648
  %v361 = vxor.u32 %v248, 2147483648
  %v362 = vxor.u32 %v251, 2147483648
  %v363 = vxor.u32 %v256, 2147483648
  %v364 = vxor.u32 %v259, 2147483648
  %v365 = vxor.u32 %v264, 2147483648
  %v366 = vxor.u32 %v267, 2147483648
  %v367 = vxor.u32 %v272, 2147483648
  %v368 = vxor.u32 %v275, 2147483648
  %v369 = vxor.u32 %v280, 2147483648
  %v370 = vxor.u32 %v283, 2147483648
  %v371 = vxor.u32 %v288, 2147483648
  %v372 = vxor.u32 %v291, 2147483648
  %v373 = vxor.u32 %v296, 2147483648
  %v374 = vxor.u32 %v299, 2147483648
  %v375 = vxor.u32 %v304, 2147483648
  %v376 = vxor.u32 %v307, 2147483648
  %v377 = vxor.u32 %v312, 2147483648
  %v378 = vxor.u32 %v315, 2147483648
  %v379 = vxor.u32 %v320, 2147483648
  %v380 = vxor.u32 %v323, 2147483648
  %v381 = vxor.u32 %v328, 2147483648
  %v382 = vxor.u32 %v331, 2147483648
  %v383 = vxor.u32 %v336, 2147483648
  %v384 = vxor.u32 %v339, 2147483648
  %v385 = vxor.u32 %v344, 2147483648
  %v386 = vxor.u32 %v347, 2147483648
  %v387 = vxor.u32 %v352, 2147483648
  %v388 = vmul.f32 %v357, 1.442695
  %v389 = vpow.pop %v388
  %v390 = vmul.f32 %v358, 1.442695
  %v391 = vpow.pop %v390
  %v392 = vmul.f32 %v359, 1.442695
  %v393 = vpow.pop %v392
  %v394 = vmul.f32 %v360, 1.442695
  %v395 = vpow.pop %v394
  %v396 = vmul.f32 %v361, 1.442695
  %v397 = vpow.pop %v396
  %v398 = vmul.f32 %v362, 1.442695
  %v399 = vpow.pop %v398
  %v400 = vmul.f32 %v363, 1.442695
  %v401 = vpow.pop %v400
  %v402 = vmul.f32 %v364, 1.442695
  %v403 = vpow.pop %v402
  %v404 = vmul.f32 %v365, 1.442695
  %v405 = vpow.pop %v404
  %v406 = vmul.f32 %v366, 1.442695
  %v407 = vpow.pop %v406
  %v408 = vmul.f32 %v367, 1.442695
  %v409 = vpow.pop %v408
  %v410 = vmul.f32 %v368, 1.442695
  %v411 = vpow.pop %v410
  %v412 = vmul.f32 %v369, 1.442695
  %v413 = vpow.pop %v412
  %v414 = vmul.f32 %v370, 1.442695
  %v415 = vpow.pop %v414
  %v416 = vmul.f32 %v371, 1.442695
  %v417 = vpow.pop %v416
  %v418 = vmul.f32 %v372, 1.442695
  %v419 = vpow.pop %v418
  %v420 = vmul.f32 %v373, 1.442695
  %v421 = vpow.pop %v420
  %v422 = vmul.f32 %v374, 1.442695
  %v423 = vpow.pop %v422
  %v424 = vmul.f32 %v375, 1.442695
  %v425 = vpow.pop %v424
  %v426 = vmul.f32 %v376, 1.442695
  %v427 = vpow.pop %v426
  %v428 = vmul.f32 %v377, 1.442695
  %v429 = vpow.pop %v428
  %v430 = vmul.f32 %v378, 1.442695
  %v431 = vpow.pop %v430
  %v432 = vmul.f32 %v379, 1.442695
  %v433 = vpow.pop %v432
  %v434 = vmul.f32 %v380, 1.442695
  %v435 = vpow.pop %v434
  %v436 = vmul.f32 %v381, 1.442695
  %v437 = vpow.pop %v436
  %v438 = vmul.f32 %v382, 1.442695
  %v439 = vpow.pop %v438
  %v440 = vmul.f32 %v383, 1.442695
  %v441 = vpow.pop %v440
  %v442 = vmul.f32 %v384, 1.442695
  %v443 = vpow.pop %v442
  %v444 = vmul.f32 %v385, 1.442695
  %v445 = vpow.pop %v444
  %v446 = vmul.f32 %v386, 1.442695
  %v447 = vpow.pop %v446
  %v448 = vmul.f32 %v387, 1.442695
  %v449 = vpow.pop %v448
  %v450 = vadd.f32 %v389, 1.0
  %v451 = vadd.f32 %v391, 1.0
  %v452 = vadd.f32 %v393, 1.0
  %v453 = vadd.f32 %v395, 1.0
  %v454 = vadd.f32 %v397, 1.0
  %v455 = vadd.f32 %v399, 1.0
  %v456 = vadd.f32 %v401, 1.0
  %v457 = vadd.f32 %v403, 1.0
  %v458 = vadd.f32 %v405, 1.0
  %v459 = vadd.f32 %v407, 1.0
  %v460 = vadd.f32 %v409, 1.0
  %v461 = vadd.f32 %v411, 1.0
  %v462 = vadd.f32 %v413, 1.0
  %v463 = vadd.f32 %v415, 1.0
  %v464 = vadd.f32 %v417, 1.0
  %v465 = vadd.f32 %v419, 1.0
  %v466 = vadd.f32 %v421, 1.0
  %v467 = vadd.f32 %v423, 1.0
  %v468 = vadd.f32 %v425, 1.0
  %v469 = vadd.f32 %v427, 1.0
  %v470 = vadd.f32 %v429, 1.0
  %v471 = vadd.f32 %v431, 1.0
  %v472 = vadd.f32 %v433, 1.0
  %v473 = vadd.f32 %v435, 1.0
  %v474 = vadd.f32 %v437, 1.0
  %v475 = vadd.f32 %v439, 1.0
  %v476 = vadd.f32 %v441, 1.0
  %v477 = vadd.f32 %v443, 1.0
  %v478 = vadd.f32 %v445, 1.0
  %v479 = vadd.f32 %v447, 1.0
  %v480 = vadd.f32 %v449, 1.0
  %v481 = vrcp.pop %v450
  %v482 = vmul.f32 1.0, %v481
  %v483 = vrcp.pop %v451
  %v484 = vmul.f32 1.0, %v483
  %v485 = vrcp.pop %v452
  %v486 = vmul.f32 1.0, %v485
  %v487 = vrcp.pop %v453
  %v488 = vmul.f32 1.0, %v487
  %v489 = vrcp.pop %v454
  %v490 = vmul.f32 1.0, %v489
  %v491 = vrcp.pop %v455
  %v492 = vmul.f32 1.0, %v491
  %v493 = vrcp.pop %v456
  %v494 = vmul.f32 1.0, %v493
  %v495 = vrcp.pop %v457
  %v496 = vmul.f32 1.0, %v495
  %v497 = vrcp.pop %v458
  %v498 = vmul.f32 1.0, %v497
  %v499 = vrcp.pop %v459
  %v500 = vmul.f32 1.0, %v499
  %v501 = vrcp.pop %v460
  %v502 = vmul.f32 1.0, %v501
  %v503 = vrcp.pop %v461
  %v504 = vmul.f32 1.0, %v503
  %v505 = vrcp.pop %v462
  %v506 = vmul.f32 1.0, %v505
  %v507 = vrcp.pop %v463
  %v508 = vmul.f32 1.0, %v507
  %v509 = vrcp.pop %v464
  %v510 = vmul.f32 1.0, %v509
  %v511 = vrcp.pop %v465
  %v512 = vmul.f32 1.0, %v511
  %v513 = vrcp.pop %v466
  %v514 = vmul.f32 1.0, %v513
  %v515 = vrcp.pop %v467
  %v516 = vmul.f32 1.0, %v515
  %v517 = vrcp.pop %v468
  %v518 = vmul.f32 1.0, %v517
  %v519 = vrcp.pop %v469
  %v520 = vmul.f32 1.0, %v519
  %v521 = vrcp.pop %v470
  %v522 = vmul.f32 1.0, %v521
  %v523 = vrcp.pop %v471
  %v524 = vmul.f32 1.0, %v523
  %v525 = vrcp.pop %v472
  %v526 = vmul.f32 1.0, %v525
  %v527 = vrcp.pop %v473
  %v528 = vmul.f32 1.0, %v527
  %v529 = vrcp.pop %v474
  %v530 = vmul.f32 1.0, %v529
  %v531 = vrcp.pop %v475
  %v532 = vmul.f32 1.0, %v531
  %v533 = vrcp.pop %v476
  %v534 = vmul.f32 1.0, %v533
  %v535 = vrcp.pop %v477
  %v536 = vmul.f32 1.0, %v535
  %v537 = vrcp.pop %v478
  %v538 = vmul.f32 1.0, %v537
  %v539 = vrcp.pop %v479
  %v540 = vmul.f32 1.0, %v539
  %v541 = vrcp.pop %v480
  %v542 = vmul.f32 1.0, %v541
  %574 = vrot.lane.b32.xlu0 %v482, 64
  %v575 = vpop.permute.xlu0 %574
  %576 = vrot.lane.b32.xlu0 %v484, 64
  %v577 = vpop.permute.xlu0 %576
  %578 = vrot.lane.b32.xlu0 %v486, 64
  %v579 = vpop.permute.xlu0 %578
  %580 = vrot.lane.b32.xlu0 %v488, 64
  %v581 = vpop.permute.xlu0 %580
  %582 = vrot.lane.b32.xlu0 %v490, 64
  %v583 = vpop.permute.xlu0 %582
  %584 = vrot.lane.b32.xlu0 %v492, 64
  %v585 = vpop.permute.xlu0 %584
  %586 = vrot.lane.b32.xlu0 %v494, 64
  %v587 = vpop.permute.xlu0 %586
  %588 = vrot.lane.b32.xlu0 %v496, 64
  %v589 = vpop.permute.xlu0 %588
  %590 = vrot.lane.b32.xlu0 %v498, 64
  %v591 = vpop.permute.xlu0 %590
  %592 = vrot.lane.b32.xlu0 %v500, 64
  %v593 = vpop.permute.xlu0 %592
  %594 = vrot.lane.b32.xlu0 %v502, 64
  %v595 = vpop.permute.xlu0 %594
  %596 = vrot.lane.b32.xlu0 %v504, 64
  %v597 = vpop.permute.xlu0 %596
  %598 = vrot.lane.b32.xlu0 %v506, 64
  %v599 = vpop.permute.xlu0 %598
  %600 = vrot.lane.b32.xlu0 %v508, 64
  %v601 = vpop.permute.xlu0 %600
  %602 = vrot.lane.b32.xlu0 %v510, 64
  %v603 = vpop.permute.xlu0 %602
  %604 = vrot.lane.b32.xlu0 %v512, 64
  %v605 = vpop.permute.xlu0 %604
  %606 = vrot.lane.b32.xlu0 %v514, 64
  %v607 = vpop.permute.xlu0 %606
  %608 = vrot.lane.b32.xlu0 %v516, 64
  %v609 = vpop.permute.xlu0 %608
  %610 = vrot.lane.b32.xlu0 %v518, 64
  %v611 = vpop.permute.xlu0 %610
  %612 = vrot.lane.b32.xlu0 %v520, 64
  %v613 = vpop.permute.xlu0 %612
  %614 = vrot.lane.b32.xlu0 %v522, 64
  %v615 = vpop.permute.xlu0 %614
  %616 = vrot.lane.b32.xlu0 %v524, 64
  %v617 = vpop.permute.xlu0 %616
  %618 = vrot.lane.b32.xlu0 %v526, 64
  %v619 = vpop.permute.xlu0 %618
  %620 = vrot.lane.b32.xlu0 %v528, 64
  %v621 = vpop.permute.xlu0 %620
  %622 = vrot.lane.b32.xlu0 %v530, 64
  %v623 = vpop.permute.xlu0 %622
  %624 = vrot.lane.b32.xlu0 %v532, 64
  %v625 = vpop.permute.xlu0 %624
  %626 = vrot.lane.b32.xlu0 %v534, 64
  %v627 = vpop.permute.xlu0 %626
  %628 = vrot.lane.b32.xlu0 %v536, 64
  %v629 = vpop.permute.xlu0 %628
  %630 = vrot.lane.b32.xlu0 %v538, 64
  %v631 = vpop.permute.xlu0 %630
  %632 = vrot.lane.b32.xlu0 %v540, 64
  %v633 = vpop.permute.xlu0 %632
  %634 = vrot.lane.b32.xlu0 %v542, 64
  %v635 = vpop.permute.xlu0 %634
  %v667 = vmul.f32 %v232, %v575
  %v668 = vmul.f32 %v235, %v577
  %v669 = vmul.f32 %v240, %v579
  %v670 = vmul.f32 %v243, %v581
  %v671 = vmul.f32 %v248, %v583
  %v672 = vmul.f32 %v251, %v585
  %v673 = vmul.f32 %v256, %v587
  %v674 = vmul.f32 %v259, %v589
  %v675 = vmul.f32 %v264, %v591
  %v676 = vmul.f32 %v267, %v593
  %v677 = vmul.f32 %v272, %v595
  %v678 = vmul.f32 %v275, %v597
  %v679 = vmul.f32 %v280, %v599
  %v680 = vmul.f32 %v283, %v601
  %v681 = vmul.f32 %v288, %v603
  %v682 = vmul.f32 %v291, %v605
  %v683 = vmul.f32 %v296, %v607
  %v684 = vmul.f32 %v299, %v609
  %v685 = vmul.f32 %v304, %v611
  %v686 = vmul.f32 %v307, %v613
  %v687 = vmul.f32 %v312, %v615
  %v688 = vmul.f32 %v315, %v617
  %v689 = vmul.f32 %v320, %v619
  %v690 = vmul.f32 %v323, %v621
  %v691 = vmul.f32 %v328, %v623
  %v692 = vmul.f32 %v331, %v625
  %v693 = vmul.f32 %v336, %v627
  %v694 = vmul.f32 %v339, %v629
  %v695 = vmul.f32 %v344, %v631
  %v696 = vmul.f32 %v347, %v633
  %v697 = vmul.f32 %v352, %v635
  %v698 = vld [vmem:[#allocation2] sm:$0x3]
  %vm699 = vcmask 523264
  %v700 = vsel %vm699, %v667, 0.0
  %v701 = vsel %vm699, %v668, 0.0
  %v702 = vadd.f32 %v700, %v701
  %v703 = vsel %vm699, %v669, 0.0
  %v704 = vadd.f32 %v702, %v703
  %v705 = vsel %vm699, %v670, 0.0
  %v706 = vadd.f32 %v704, %v705
  %v707 = vsel %vm699, %v671, 0.0
  %v708 = vadd.f32 %v706, %v707
  %v709 = vsel %vm699, %v672, 0.0
  %v710 = vadd.f32 %v708, %v709
  %v711 = vsel %vm699, %v673, 0.0
  %v712 = vadd.f32 %v710, %v711
  %v713 = vsel %vm699, %v674, 0.0
  %v714 = vadd.f32 %v712, %v713
  %v715 = vsel %vm699, %v675, 0.0
  %v716 = vadd.f32 %v714, %v715
  %v717 = vsel %vm699, %v676, 0.0
  %v718 = vadd.f32 %v716, %v717
  %v719 = vsel %vm699, %v677, 0.0
  %v720 = vadd.f32 %v718, %v719
  %v721 = vsel %vm699, %v678, 0.0
  %v722 = vadd.f32 %v720, %v721
  %v723 = vsel %vm699, %v679, 0.0
  %v724 = vadd.f32 %v722, %v723
  %v725 = vsel %vm699, %v680, 0.0
  %v726 = vadd.f32 %v724, %v725
  %v727 = vsel %vm699, %v681, 0.0
  %v728 = vadd.f32 %v726, %v727
  %v729 = vsel %vm699, %v682, 0.0
  %v730 = vadd.f32 %v728, %v729
  %v731 = vsel %vm699, %v683, 0.0
  %v732 = vadd.f32 %v730, %v731
  %v733 = vsel %vm699, %v684, 0.0
  %v734 = vadd.f32 %v732, %v733
  %v735 = vsel %vm699, %v685, 0.0
  %v736 = vadd.f32 %v734, %v735
  %v737 = vsel %vm699, %v686, 0.0
  %v738 = vadd.f32 %v736, %v737
  %v739 = vsel %vm699, %v687, 0.0
  %v740 = vadd.f32 %v738, %v739
  %v741 = vsel %vm699, %v688, 0.0
  %v742 = vadd.f32 %v740, %v741
  %v743 = vsel %vm699, %v689, 0.0
  %v744 = vadd.f32 %v742, %v743
  %v745 = vsel %vm699, %v690, 0.0
  %v746 = vadd.f32 %v744, %v745
  %v747 = vsel %vm699, %v691, 0.0
  %v748 = vadd.f32 %v746, %v747
  %v749 = vsel %vm699, %v692, 0.0
  %v750 = vadd.f32 %v748, %v749
  %v751 = vsel %vm699, %v693, 0.0
  %v752 = vadd.f32 %v750, %v751
  %v753 = vsel %vm699, %v694, 0.0
  %v754 = vadd.f32 %v752, %v753
  %v755 = vsel %vm699, %v695, 0.0
  %v756 = vadd.f32 %v754, %v755
  %v757 = vsel %vm699, %v696, 0.0
  %v758 = vadd.f32 %v756, %v757
  %v759 = vsel %vm699, %v697, 0.0
  %v760 = vadd.f32 %v758, %v759
  %v761 = vrot.slane %v760, 4
  %v762 = vadd.f32 %v760, %v761
  %v763 = vrot.slane %v762, 2
  %v764 = vadd.f32 %v762, %v763
  %v765 = vrot.slane %v764, 1
  %v766 = vadd.f32 %v764, %v765
  %v767 = vmul.f32 %v667, %v667
  %v768 = vmul.f32 %v668, %v668
  %v769 = vmul.f32 %v669, %v669
  %v770 = vmul.f32 %v670, %v670
  %v771 = vmul.f32 %v671, %v671
  %v772 = vmul.f32 %v672, %v672
  %v773 = vmul.f32 %v673, %v673
  %v774 = vmul.f32 %v674, %v674
  %v775 = vmul.f32 %v675, %v675
  %v776 = vmul.f32 %v676, %v676
  %v777 = vmul.f32 %v677, %v677
  %v778 = vmul.f32 %v678, %v678
  %v779 = vmul.f32 %v679, %v679
  %v780 = vmul.f32 %v680, %v680
  %v781 = vmul.f32 %v681, %v681
  %v782 = vmul.f32 %v682, %v682
  %v783 = vmul.f32 %v683, %v683
  %v784 = vmul.f32 %v684, %v684
  %v785 = vmul.f32 %v685, %v685
  %v786 = vmul.f32 %v686, %v686
  %v787 = vmul.f32 %v687, %v687
  %v788 = vmul.f32 %v688, %v688
  %v789 = vmul.f32 %v689, %v689
  %v790 = vmul.f32 %v690, %v690
  %v791 = vmul.f32 %v691, %v691
  %v792 = vmul.f32 %v692, %v692
  %v793 = vmul.f32 %v693, %v693
  %v794 = vmul.f32 %v694, %v694
  %v795 = vmul.f32 %v695, %v695
  %v796 = vmul.f32 %v696, %v696
  %v797 = vmul.f32 %v697, %v697
  %v798 = vsel %vm699, %v767, 0.0
  %v799 = vsel %vm699, %v768, 0.0
  %v800 = vadd.f32 %v798, %v799
  %v801 = vsel %vm699, %v769, 0.0
  %v802 = vadd.f32 %v800, %v801
  %v803 = vsel %vm699, %v770, 0.0
  %v804 = vadd.f32 %v802, %v803
  %v805 = vsel %vm699, %v771, 0.0
  %v806 = vadd.f32 %v804, %v805
  %v807 = vsel %vm699, %v772, 0.0
  %v808 = vadd.f32 %v806, %v807
  %v809 = vsel %vm699, %v773, 0.0
  %v810 = vadd.f32 %v808, %v809
  %v811 = vsel %vm699, %v774, 0.0
  %v812 = vadd.f32 %v810, %v811
  %v813 = vsel %vm699, %v775, 0.0
  %v814 = vadd.f32 %v812, %v813
  %v815 = vsel %vm699, %v776, 0.0
  %v816 = vadd.f32 %v814, %v815
  %v817 = vsel %vm699, %v777, 0.0
  %v818 = vadd.f32 %v816, %v817
  %v819 = vsel %vm699, %v778, 0.0
  %v820 = vadd.f32 %v818, %v819
  %v821 = vsel %vm699, %v779, 0.0
  %v822 = vadd.f32 %v820, %v821
  %v823 = vsel %vm699, %v780, 0.0
  %v824 = vadd.f32 %v822, %v823
  %v825 = vsel %vm699, %v781, 0.0
  %v826 = vadd.f32 %v824, %v825
  %v827 = vsel %vm699, %v782, 0.0
  %v828 = vadd.f32 %v826, %v827
  %v829 = vsel %vm699, %v783, 0.0
  %v830 = vadd.f32 %v828, %v829
  %v831 = vsel %vm699, %v784, 0.0
  %v832 = vadd.f32 %v830, %v831
  %v833 = vsel %vm699, %v785, 0.0
  %v834 = vadd.f32 %v832, %v833
  %v835 = vsel %vm699, %v786, 0.0
  %v836 = vadd.f32 %v834, %v835
  %v837 = vsel %vm699, %v787, 0.0
  %v838 = vadd.f32 %v836, %v837
  %v839 = vsel %vm699, %v788, 0.0
  %v840 = vadd.f32 %v838, %v839
  %v841 = vsel %vm699, %v789, 0.0
  %v842 = vadd.f32 %v840, %v841
  %v843 = vsel %vm699, %v790, 0.0
  %v844 = vadd.f32 %v842, %v843
  %v845 = vsel %vm699, %v791, 0.0
  %v846 = vadd.f32 %v844, %v845
  %v847 = vsel %vm699, %v792, 0.0
  %v848 = vadd.f32 %v846, %v847
  %v849 = vsel %vm699, %v793, 0.0
  %v850 = vadd.f32 %v848, %v849
  %v851 = vsel %vm699, %v794, 0.0
  %v852 = vadd.f32 %v850, %v851
  %v853 = vsel %vm699, %v795, 0.0
  %v854 = vadd.f32 %v852, %v853
  %v855 = vsel %vm699, %v796, 0.0
  %v856 = vadd.f32 %v854, %v855
  %v857 = vsel %vm699, %v797, 0.0
  %v858 = vadd.f32 %v856, %v857
  %v859 = vrot.slane %v858, 4
  %v860 = vadd.f32 %v858, %v859
  %v861 = vrot.slane %v860, 2
  %v862 = vadd.f32 %v860, %v861
  %v863 = vrot.slane %v862, 1
  %v864 = vadd.f32 %v862, %v863
  %vm865 = vcmask 1040384
  %v866 = vsel %vm865, %v766, %v864
  %v867 = vadd.f32 %v698, %v866
  %vm868 = vcmask 517120
  %869 = vst.msk [vmem:[#allocation2] sm:$0x3] %vm868, %v867
  %870 = vst.msk [vmem:[%s5] sm:$0xff] %vm699, %v667
  %871 = vst.msk [vmem:[%s5 + $0x8] sm:$0xff] %vm699, %v668
  %872 = vst.msk [vmem:[%s5 + $0x10] sm:$0xff] %vm699, %v669
  %873 = vst.msk [vmem:[%s5 + $0x18] sm:$0xff] %vm699, %v670
  %874 = vst.msk [vmem:[%s5 + $0x20] sm:$0xff] %vm699, %v671
  %875 = vst.msk [vmem:[%s5 + $0x28] sm:$0xff] %vm699, %v672
  %876 = vst.msk [vmem:[%s5 + $0x30] sm:$0xff] %vm699, %v673
  %877 = vst.msk [vmem:[%s5 + $0x38] sm:$0xff] %vm699, %v674
  %878 = vst.msk [vmem:[%s5 + $0x40] sm:$0xff] %vm699, %v675
  %879 = vst.msk [vmem:[%s5 + $0x48] sm:$0xff] %vm699, %v676
  %880 = vst.msk [vmem:[%s5 + $0x50] sm:$0xff] %vm699, %v677
  %881 = vst.msk [vmem:[%s5 + $0x58] sm:$0xff] %vm699, %v678
  %882 = vst.msk [vmem:[%s5 + $0x60] sm:$0xff] %vm699, %v679
  %883 = vst.msk [vmem:[%s5 + $0x68] sm:$0xff] %vm699, %v680
  %884 = vst.msk [vmem:[%s5 + $0x70] sm:$0xff] %vm699, %v681
  %885 = vst.msk [vmem:[%s5 + $0x78] sm:$0xff] %vm699, %v682
  %886 = vst.msk [vmem:[%s5 + $0x80] sm:$0xff] %vm699, %v683
  %887 = vst.msk [vmem:[%s5 + $0x88] sm:$0xff] %vm699, %v684
  %888 = vst.msk [vmem:[%s5 + $0x90] sm:$0xff] %vm699, %v685
  %889 = vst.msk [vmem:[%s5 + $0x98] sm:$0xff] %vm699, %v686
  %890 = vst.msk [vmem:[%s5 + $0xa0] sm:$0xff] %vm699, %v687
  %891 = vst.msk [vmem:[%s5 + $0xa8] sm:$0xff] %vm699, %v688
  %892 = vst.msk [vmem:[%s5 + $0xb0] sm:$0xff] %vm699, %v689
  %893 = vst.msk [vmem:[%s5 + $0xb8] sm:$0xff] %vm699, %v690
  %894 = vst.msk [vmem:[%s5 + $0xc0] sm:$0xff] %vm699, %v691
  %895 = vst.msk [vmem:[%s5 + $0xc8] sm:$0xff] %vm699, %v692
  %896 = vst.msk [vmem:[%s5 + $0xd0] sm:$0xff] %vm699, %v693
  %897 = vst.msk [vmem:[%s5 + $0xd8] sm:$0xff] %vm699, %v694
  %898 = vst.msk [vmem:[%s5 + $0xe0] sm:$0xff] %vm699, %v695
  %899 = vst.msk [vmem:[%s5 + $0xe8] sm:$0xff] %vm699, %v696
  %900 = vst.msk [vmem:[%s5 + $0xf0] sm:$0xff] %vm699, %v697
  // Predicated region
  $region26: #{tpu_custom_call.1} parent=0 // pred_check
    %p901 = pneg %p21
  $region27: #{tpu_custom_call.1} parent=0 // pred_check_branch
    %903 = sbr.rel (%p901) target = $region29
  $region28: #{tpu_custom_call.1} parent=0 // pred_region
    %v904 = vld [vmem:[#allocation2] sm:$0x3]
    %v905 = vmul.f32 %v904, 0.004032258
    %v906 = vmul.f32 %v905, %v905
    %v908 = vrot.slane %v906, 7
    %v910 = vsub.f32 %v905, %v908
    %v911 = vmax.f32 %v910, 0.0
    %v912 = vld [vmem:[%s3] sm:$0x1]
    %v913 = vadd.f32 %v911, 1e-05
    %v914 = vrsqrt.pop %v913
    %v917 = vunpack.c.l.s4 1966171168
    %v918 = vunpack.c.0.s8 %v917
    %v919 = vlaneseq
    %v920 = vshrl.u32 %v919, 7
    %v921 = vsub.s32 %v918, %v920
    %v922 = vrot.slane %v914, %v921
    %v923 = vcombine.high %v922, %v922
    %v925 = vunpack.c.l.s4 1966171168
    %v926 = vunpack.c.0.s8 %v925
    %v927 = vlaneseq
    %v928 = vshrl.u32 %v927, 7
    %v929 = vsub.s32 %v926, %v928
    %v930 = vrot.slane %v923, %v929
    %v932 = vmul.f32 %v912, %v930
    %v933 = vld [vmem:[%s4] sm:$0x1]
    %v934 = vmul.f32 %v905, %v932
    %v935 = vsub.f32 %v933, %v934
    %v936 = vld [vmem:[%s5] sm:$0xff]
    %v937 = vld [vmem:[%s5 + $0x8] sm:$0xff]
    %v938 = vld [vmem:[%s5 + $0x10] sm:$0xff]
    %v939 = vld [vmem:[%s5 + $0x18] sm:$0xff]
    %v940 = vld [vmem:[%s5 + $0x20] sm:$0xff]
    %v941 = vld [vmem:[%s5 + $0x28] sm:$0xff]
    %v942 = vld [vmem:[%s5 + $0x30] sm:$0xff]
    %v943 = vld [vmem:[%s5 + $0x38] sm:$0xff]
    %v944 = vld [vmem:[%s5 + $0x40] sm:$0xff]
    %v945 = vld [vmem:[%s5 + $0x48] sm:$0xff]
    %v946 = vld [vmem:[%s5 + $0x50] sm:$0xff]
    %v947 = vld [vmem:[%s5 + $0x58] sm:$0xff]
    %v948 = vld [vmem:[%s5 + $0x60] sm:$0xff]
    %v949 = vld [vmem:[%s5 + $0x68] sm:$0xff]
    %v950 = vld [vmem:[%s5 + $0x70] sm:$0xff]
    %v951 = vld [vmem:[%s5 + $0x78] sm:$0xff]
    %v952 = vld [vmem:[%s5 + $0x80] sm:$0xff]
    %v953 = vld [vmem:[%s5 + $0x88] sm:$0xff]
    %v954 = vld [vmem:[%s5 + $0x90] sm:$0xff]
    %v955 = vld [vmem:[%s5 + $0x98] sm:$0xff]
    %v956 = vld [vmem:[%s5 + $0xa0] sm:$0xff]
    %v957 = vld [vmem:[%s5 + $0xa8] sm:$0xff]
    %v958 = vld [vmem:[%s5 + $0xb0] sm:$0xff]
    %v959 = vld [vmem:[%s5 + $0xb8] sm:$0xff]
    %v960 = vld [vmem:[%s5 + $0xc0] sm:$0xff]
    %v961 = vld [vmem:[%s5 + $0xc8] sm:$0xff]
    %v962 = vld [vmem:[%s5 + $0xd0] sm:$0xff]
    %v963 = vld [vmem:[%s5 + $0xd8] sm:$0xff]
    %v964 = vld [vmem:[%s5 + $0xe0] sm:$0xff]
    %v965 = vld [vmem:[%s5 + $0xe8] sm:$0xff]
    %v966 = vld [vmem:[%s5 + $0xf0] sm:$0xff]
    %v968 = vlaneseq
    %v969 = vshrl.u32 %v968, 7
    %v970 = vsub.s32 0, %v969
    %v971 = vrot.slane %v932, %v970
    %v973 = vmul.f32 %v936, %v971
    %v974 = vmul.f32 %v937, %v971
    %v975 = vmul.f32 %v938, %v971
    %v976 = vmul.f32 %v939, %v971
    %v977 = vmul.f32 %v940, %v971
    %v978 = vmul.f32 %v941, %v971
    %v979 = vmul.f32 %v942, %v971
    %v980 = vmul.f32 %v943, %v971
    %v981 = vmul.f32 %v944, %v971
    %v982 = vmul.f32 %v945, %v971
    %v983 = vmul.f32 %v946, %v971
    %v984 = vmul.f32 %v947, %v971
    %v985 = vmul.f32 %v948, %v971
    %v986 = vmul.f32 %v949, %v971
    %v987 = vmul.f32 %v950, %v971
    %v988 = vmul.f32 %v951, %v971
    %v989 = vmul.f32 %v952, %v971
    %v990 = vmul.f32 %v953, %v971
    %v991 = vmul.f32 %v954, %v971
    %v992 = vmul.f32 %v955, %v971
    %v993 = vmul.f32 %v956, %v971
    %v994 = vmul.f32 %v957, %v971
    %v995 = vmul.f32 %v958, %v971
    %v996 = vmul.f32 %v959, %v971
    %v997 = vmul.f32 %v960, %v971
    %v998 = vmul.f32 %v961, %v971
    %v999 = vmul.f32 %v962, %v971
    %v1000 = vmul.f32 %v963, %v971
    %v1001 = vmul.f32 %v964, %v971
    %v1002 = vmul.f32 %v965, %v971
    %v1003 = vmul.f32 %v966, %v971
    %v1005 = vlaneseq
    %v1006 = vshrl.u32 %v1005, 7
    %v1007 = vsub.s32 0, %v1006
    %v1008 = vrot.slane %v935, %v1007
    %v1010 = vadd.f32 %v973, %v1008
    %v1011 = vadd.f32 %v974, %v1008
    %v1012 = vadd.f32 %v975, %v1008
    %v1013 = vadd.f32 %v976, %v1008
    %v1014 = vadd.f32 %v977, %v1008
    %v1015 = vadd.f32 %v978, %v1008
    %v1016 = vadd.f32 %v979, %v1008
    %v1017 = vadd.f32 %v980, %v1008
    %v1018 = vadd.f32 %v981, %v1008
    %v1019 = vadd.f32 %v982, %v1008
    %v1020 = vadd.f32 %v983, %v1008
    %v1021 = vadd.f32 %v984, %v1008
    %v1022 = vadd.f32 %v985, %v1008
    %v1023 = vadd.f32 %v986, %v1008
    %v1024 = vadd.f32 %v987, %v1008
    %v1025 = vadd.f32 %v988, %v1008
    %v1026 = vadd.f32 %v989, %v1008
    %v1027 = vadd.f32 %v990, %v1008
    %v1028 = vadd.f32 %v991, %v1008
    %v1029 = vadd.f32 %v992, %v1008
    %v1030 = vadd.f32 %v993, %v1008
    %v1031 = vadd.f32 %v994, %v1008
    %v1032 = vadd.f32 %v995, %v1008
    %v1033 = vadd.f32 %v996, %v1008
    %v1034 = vadd.f32 %v997, %v1008
    %v1035 = vadd.f32 %v998, %v1008
    %v1036 = vadd.f32 %v999, %v1008
    %v1037 = vadd.f32 %v1000, %v1008
    %v1038 = vadd.f32 %v1001, %v1008
    %v1039 = vadd.f32 %v1002, %v1008
    %v1040 = vadd.f32 %v1003, %v1008
    %vm1041 = vcmp.gt.f32.partialorder %v1010, 0.0
    %vm1042 = vcmp.gt.f32.partialorder %v1011, 0.0
    %vm1043 = vcmp.gt.f32.partialorder %v1012, 0.0
    %vm1044 = vcmp.gt.f32.partialorder %v1013, 0.0
    %vm1045 = vcmp.gt.f32.partialorder %v1014, 0.0
    %vm1046 = vcmp.gt.f32.partialorder %v1015, 0.0
    %vm1047 = vcmp.gt.f32.partialorder %v1016, 0.0
    %vm1048 = vcmp.gt.f32.partialorder %v1017, 0.0
    %vm1049 = vcmp.gt.f32.partialorder %v1018, 0.0
    %vm1050 = vcmp.gt.f32.partialorder %v1019, 0.0
    %vm1051 = vcmp.gt.f32.partialorder %v1020, 0.0
    %vm1052 = vcmp.gt.f32.partialorder %v1021, 0.0
    %vm1053 = vcmp.gt.f32.partialorder %v1022, 0.0
    %vm1054 = vcmp.gt.f32.partialorder %v1023, 0.0
    %vm1055 = vcmp.gt.f32.partialorder %v1024, 0.0
    %vm1056 = vcmp.gt.f32.partialorder %v1025, 0.0
    %vm1057 = vcmp.gt.f32.partialorder %v1026, 0.0
    %vm1058 = vcmp.gt.f32.partialorder %v1027, 0.0
    %vm1059 = vcmp.gt.f32.partialorder %v1028, 0.0
    %vm1060 = vcmp.gt.f32.partialorder %v1029, 0.0
    %vm1061 = vcmp.gt.f32.partialorder %v1030, 0.0
    %vm1062 = vcmp.gt.f32.partialorder %v1031, 0.0
    %vm1063 = vcmp.gt.f32.partialorder %v1032, 0.0
    %vm1064 = vcmp.gt.f32.partialorder %v1033, 0.0
    %vm1065 = vcmp.gt.f32.partialorder %v1034, 0.0
    %vm1066 = vcmp.gt.f32.partialorder %v1035, 0.0
    %vm1067 = vcmp.gt.f32.partialorder %v1036, 0.0
    %vm1068 = vcmp.gt.f32.partialorder %v1037, 0.0
    %vm1069 = vcmp.gt.f32.partialorder %v1038, 0.0
    %vm1070 = vcmp.gt.f32.partialorder %v1039, 0.0
    %vm1071 = vcmp.gt.f32.partialorder %v1040, 0.0
    %v1072 = vmin.f32 %v1010, 0.0
    %v1073 = vmin.f32 %v1011, 0.0
    %v1074 = vmin.f32 %v1012, 0.0
    %v1075 = vmin.f32 %v1013, 0.0
    %v1076 = vmin.f32 %v1014, 0.0
    %v1077 = vmin.f32 %v1015, 0.0
    %v1078 = vmin.f32 %v1016, 0.0
    %v1079 = vmin.f32 %v1017, 0.0
    %v1080 = vmin.f32 %v1018, 0.0
    %v1081 = vmin.f32 %v1019, 0.0
    %v1082 = vmin.f32 %v1020, 0.0
    %v1083 = vmin.f32 %v1021, 0.0
    %v1084 = vmin.f32 %v1022, 0.0
    %v1085 = vmin.f32 %v1023, 0.0
    %v1086 = vmin.f32 %v1024, 0.0
    %v1087 = vmin.f32 %v1025, 0.0
    %v1088 = vmin.f32 %v1026, 0.0
    %v1089 = vmin.f32 %v1027, 0.0
    %v1090 = vmin.f32 %v1028, 0.0
    %v1091 = vmin.f32 %v1029, 0.0
    %v1092 = vmin.f32 %v1030, 0.0
    %v1093 = vmin.f32 %v1031, 0.0
    %v1094 = vmin.f32 %v1032, 0.0
    %v1095 = vmin.f32 %v1033, 0.0
    %v1096 = vmin.f32 %v1034, 0.0
    %v1097 = vmin.f32 %v1035, 0.0
    %v1098 = vmin.f32 %v1036, 0.0
    %v1099 = vmin.f32 %v1037, 0.0
    %v1100 = vmin.f32 %v1038, 0.0
    %v1101 = vmin.f32 %v1039, 0.0
    %v1102 = vmin.f32 %v1040, 0.0
    %v1103 = vmul.f32 %v1072, 1.442695
    %v1104 = vpow.pop %v1103
    %v1105 = vmul.f32 %v1073, 1.442695
    %v1106 = vpow.pop %v1105
    %v1107 = vmul.f32 %v1074, 1.442695
    %v1108 = vpow.pop %v1107
    %v1109 = vmul.f32 %v1075, 1.442695
    %v1110 = vpow.pop %v1109
    %v1111 = vmul.f32 %v1076, 1.442695
    %v1112 = vpow.pop %v1111
    %v1113 = vmul.f32 %v1077, 1.442695
    %v1114 = vpow.pop %v1113
    %v1115 = vmul.f32 %v1078, 1.442695
    %v1116 = vpow.pop %v1115
    %v1117 = vmul.f32 %v1079, 1.442695
    %v1118 = vpow.pop %v1117
    %v1119 = vmul.f32 %v1080, 1.442695
    %v1120 = vpow.pop %v1119
    %v1121 = vmul.f32 %v1081, 1.442695
    %v1122 = vpow.pop %v1121
    %v1123 = vmul.f32 %v1082, 1.442695
    %v1124 = vpow.pop %v1123
    %v1125 = vmul.f32 %v1083, 1.442695
    %v1126 = vpow.pop %v1125
    %v1127 = vmul.f32 %v1084, 1.442695
    %v1128 = vpow.pop %v1127
    %v1129 = vmul.f32 %v1085, 1.442695
    %v1130 = vpow.pop %v1129
    %v1131 = vmul.f32 %v1086, 1.442695
    %v1132 = vpow.pop %v1131
    %v1133 = vmul.f32 %v1087, 1.442695
    %v1134 = vpow.pop %v1133
    %v1135 = vmul.f32 %v1088, 1.442695
    %v1136 = vpow.pop %v1135
    %v1137 = vmul.f32 %v1089, 1.442695
    %v1138 = vpow.pop %v1137
    %v1139 = vmul.f32 %v1090, 1.442695
    %v1140 = vpow.pop %v1139
    %v1141 = vmul.f32 %v1091, 1.442695
    %v1142 = vpow.pop %v1141
    %v1143 = vmul.f32 %v1092, 1.442695
    %v1144 = vpow.pop %v1143
    %v1145 = vmul.f32 %v1093, 1.442695
    %v1146 = vpow.pop %v1145
    %v1147 = vmul.f32 %v1094, 1.442695
    %v1148 = vpow.pop %v1147
    %v1149 = vmul.f32 %v1095, 1.442695
    %v1150 = vpow.pop %v1149
    %v1151 = vmul.f32 %v1096, 1.442695
    %v1152 = vpow.pop %v1151
    %v1153 = vmul.f32 %v1097, 1.442695
    %v1154 = vpow.pop %v1153
    %v1155 = vmul.f32 %v1098, 1.442695
    %v1156 = vpow.pop %v1155
    %v1157 = vmul.f32 %v1099, 1.442695
    %v1158 = vpow.pop %v1157
    %v1159 = vmul.f32 %v1100, 1.442695
    %v1160 = vpow.pop %v1159
    %v1161 = vmul.f32 %v1101, 1.442695
    %v1162 = vpow.pop %v1161
    %v1163 = vmul.f32 %v1102, 1.442695
    %v1164 = vpow.pop %v1163
    %v1165 = vsub.f32 %v1104, 1.0
    %v1166 = vsub.f32 %v1106, 1.0
    %v1167 = vsub.f32 %v1108, 1.0
    %v1168 = vsub.f32 %v1110, 1.0
    %v1169 = vsub.f32 %v1112, 1.0
    %v1170 = vsub.f32 %v1114, 1.0
    %v1171 = vsub.f32 %v1116, 1.0
    %v1172 = vsub.f32 %v1118, 1.0
    %v1173 = vsub.f32 %v1120, 1.0
    %v1174 = vsub.f32 %v1122, 1.0
    %v1175 = vsub.f32 %v1124, 1.0
    %v1176 = vsub.f32 %v1126, 1.0
    %v1177 = vsub.f32 %v1128, 1.0
    %v1178 = vsub.f32 %v1130, 1.0
    %v1179 = vsub.f32 %v1132, 1.0
    %v1180 = vsub.f32 %v1134, 1.0
    %v1181 = vsub.f32 %v1136, 1.0
    %v1182 = vsub.f32 %v1138, 1.0
    %v1183 = vsub.f32 %v1140, 1.0
    %v1184 = vsub.f32 %v1142, 1.0
    %v1185 = vsub.f32 %v1144, 1.0
    %v1186 = vsub.f32 %v1146, 1.0
    %v1187 = vsub.f32 %v1148, 1.0
    %v1188 = vsub.f32 %v1150, 1.0
    %v1189 = vsub.f32 %v1152, 1.0
    %v1190 = vsub.f32 %v1154, 1.0
    %v1191 = vsub.f32 %v1156, 1.0
    %v1192 = vsub.f32 %v1158, 1.0
    %v1193 = vsub.f32 %v1160, 1.0
    %v1194 = vsub.f32 %v1162, 1.0
    %v1195 = vsub.f32 %v1164, 1.0
    %v1196 = vsel %vm1041, %v1010, %v1165
    %v1197 = vsel %vm1042, %v1011, %v1166
    %v1198 = vsel %vm1043, %v1012, %v1167
    %v1199 = vsel %vm1044, %v1013, %v1168
    %v1200 = vsel %vm1045, %v1014, %v1169
    %v1201 = vsel %vm1046, %v1015, %v1170
    %v1202 = vsel %vm1047, %v1016, %v1171
    %v1203 = vsel %vm1048, %v1017, %v1172
    %v1204 = vsel %vm1049, %v1018, %v1173
    %v1205 = vsel %vm1050, %v1019, %v1174
    %v1206 = vsel %vm1051, %v1020, %v1175
    %v1207 = vsel %vm1052, %v1021, %v1176
    %v1208 = vsel %vm1053, %v1022, %v1177
    %v1209 = vsel %vm1054, %v1023, %v1178
    %v1210 = vsel %vm1055, %v1024, %v1179
    %v1211 = vsel %vm1056, %v1025, %v1180
    %v1212 = vsel %vm1057, %v1026, %v1181
    %v1213 = vsel %vm1058, %v1027, %v1182
    %v1214 = vsel %vm1059, %v1028, %v1183
    %v1215 = vsel %vm1060, %v1029, %v1184
    %v1216 = vsel %vm1061, %v1030, %v1185
    %v1217 = vsel %vm1062, %v1031, %v1186
    %v1218 = vsel %vm1063, %v1032, %v1187
    %v1219 = vsel %vm1064, %v1033, %v1188
    %v1220 = vsel %vm1065, %v1034, %v1189
    %v1221 = vsel %vm1066, %v1035, %v1190
    %v1222 = vsel %vm1067, %v1036, %v1191
    %v1223 = vsel %vm1068, %v1037, %v1192
    %v1224 = vsel %vm1069, %v1038, %v1193
    %v1225 = vsel %vm1070, %v1039, %v1194
    %v1226 = vsel %vm1071, %v1040, %v1195
    %1227 = vst.msk [vmem:[%s5] sm:$0xff] %vm699, %v1196
    %1228 = vst.msk [vmem:[%s5 + $0x8] sm:$0xff] %vm699, %v1197
    %1229 = vst.msk [vmem:[%s5 + $0x10] sm:$0xff] %vm699, %v1198
    %1230 = vst.msk [vmem:[%s5 + $0x18] sm:$0xff] %vm699, %v1199
    %1231 = vst.msk [vmem:[%s5 + $0x20] sm:$0xff] %vm699, %v1200
    %1232 = vst.msk [vmem:[%s5 + $0x28] sm:$0xff] %vm699, %v1201
    %1233 = vst.msk [vmem:[%s5 + $0x30] sm:$0xff] %vm699, %v1202
    %1234 = vst.msk [vmem:[%s5 + $0x38] sm:$0xff] %vm699, %v1203
    %1235 = vst.msk [vmem:[%s5 + $0x40] sm:$0xff] %vm699, %v1204
    %1236 = vst.msk [vmem:[%s5 + $0x48] sm:$0xff] %vm699, %v1205
    %1237 = vst.msk [vmem:[%s5 + $0x50] sm:$0xff] %vm699, %v1206
    %1238 = vst.msk [vmem:[%s5 + $0x58] sm:$0xff] %vm699, %v1207
    %1239 = vst.msk [vmem:[%s5 + $0x60] sm:$0xff] %vm699, %v1208
    %1240 = vst.msk [vmem:[%s5 + $0x68] sm:$0xff] %vm699, %v1209
    %1241 = vst.msk [vmem:[%s5 + $0x70] sm:$0xff] %vm699, %v1210
    %1242 = vst.msk [vmem:[%s5 + $0x78] sm:$0xff] %vm699, %v1211
    %1243 = vst.msk [vmem:[%s5 + $0x80] sm:$0xff] %vm699, %v1212
    %1244 = vst.msk [vmem:[%s5 + $0x88] sm:$0xff] %vm699, %v1213
    %1245 = vst.msk [vmem:[%s5 + $0x90] sm:$0xff] %vm699, %v1214
    %1246 = vst.msk [vmem:[%s5 + $0x98] sm:$0xff] %vm699, %v1215
    %1247 = vst.msk [vmem:[%s5 + $0xa0] sm:$0xff] %vm699, %v1216
    %1248 = vst.msk [vmem:[%s5 + $0xa8] sm:$0xff] %vm699, %v1217
    %1249 = vst.msk [vmem:[%s5 + $0xb0] sm:$0xff] %vm699, %v1218
    %1250 = vst.msk [vmem:[%s5 + $0xb8] sm:$0xff] %vm699, %v1219
    %1251 = vst.msk [vmem:[%s5 + $0xc0] sm:$0xff] %vm699, %v1220
    %1252 = vst.msk [vmem:[%s5 + $0xc8] sm:$0xff] %vm699, %v1221
    %1253 = vst.msk [vmem:[%s5 + $0xd0] sm:$0xff] %vm699, %v1222
    %1254 = vst.msk [vmem:[%s5 + $0xd8] sm:$0xff] %vm699, %v1223
    %1255 = vst.msk [vmem:[%s5 + $0xe0] sm:$0xff] %vm699, %v1224
    %1256 = vst.msk [vmem:[%s5 + $0xe8] sm:$0xff] %vm699, %v1225
    %1257 = vst.msk [vmem:[%s5 + $0xf0] sm:$0xff] %vm699, %v1226
  $region29: #{tpu_custom_call.1} parent=0 // pred_fallthru
    _
  // Predicated region
  $region30: #{tpu_custom_call.1} parent=0 // pred_check
    _
  $region31: #{tpu_custom_call.1} parent=0 // pred_check_branch
    %1259 = sbr.rel (0) target = $region33
  $region32: #{tpu_custom_call.1} parent=0 // pred_region
    _
  $region33: #{tpu_custom_call.1} parent=0 // pred_fallthru
    _
  // Predicated region
  $region34: #{tpu_custom_call.1} parent=0 // pred_check
    _
  $region35: #{tpu_custom_call.1} parent=0 // pred_check_branch
    %1261 = sbr.rel (0) target = $region37
  $region36: #{tpu_custom_call.1} parent=0 // pred_region
    _
  $region37: #{tpu_custom_call.1} parent=0 // pred_fallthru
    _

</llo_original>
